<compile_context>
chip_gen: v7x
topology: tpu7x:2x2x1
jax: 0.10.0
libtpu: 0.0.40
codegen_flags: <defaults>
</compile_context>

<pallas_src>
import functools
import math

import jax
import jax.numpy as jnp
from jax.experimental import pallas as pl
from jax.experimental.pallas import tpu as pltpu

# Make non-Pallas matmuls (reference einsums, interpret-mode kernel dots)
# run at full f32 precision so they agree with the kernel's MXU f32 path.
jax.config.update("jax_default_matmul_precision", "highest")


def _attn_kernel(*refs, scale, has_mask):
    """Online-softmax attention for one (batch, q_tile) against kv tiles."""
    if has_mask:
        q_ref, k_ref, v_ref, mask_ref, o_ref, m_sc, l_sc, acc_sc = refs
    else:
        q_ref, k_ref, v_ref, o_ref, m_sc, l_sc, acc_sc = refs
        mask_ref = None

    ki = pl.program_id(2)

    @pl.when(ki == 0)
    def _init():
        m_sc[...] = jnp.full(m_sc.shape, -jnp.inf, m_sc.dtype)
        l_sc[...] = jnp.zeros(l_sc.shape, l_sc.dtype)
        acc_sc[...] = jnp.zeros(acc_sc.shape, acc_sc.dtype)

    # (tq, C) x (tkv, C) contracted over C -> (tq, tkv) on the MXU, f32 acc.
    s = jax.lax.dot_general(
        q_ref[...], k_ref[...],
        dimension_numbers=(((1,), (1,)), ((), ())),
        preferred_element_type=jnp.float32) * scale
    if has_mask:
        s = s + mask_ref[...].astype(jnp.float32) * (-1e9)

    m_prev = m_sc[...]                                        # (tq, 1)
    m_new = jnp.maximum(m_prev, jnp.max(s, axis=-1, keepdims=True))
    alpha = jnp.exp(m_prev - m_new)                           # rescale factor
    p = jnp.exp(s - m_new)                                    # (tq, tkv)
    l_sc[...] = alpha * l_sc[...] + jnp.sum(p, axis=-1, keepdims=True)
    acc_sc[...] = alpha * acc_sc[...] + jnp.dot(
        p.astype(v_ref.dtype), v_ref[...], preferred_element_type=jnp.float32)
    m_sc[...] = m_new

    @pl.when(ki == pl.num_programs(2) - 1)
    def _finalize():
        inv_l = pl.reciprocal(l_sc[...], approx=False)        # exact
        o_ref[...] = (acc_sc[...] * inv_l).astype(o_ref.dtype)


def attention(query, key, value, mask=None, *, tile_q=None, tile_kv=None,
              vmem_limit_bytes=None):
    """query/key/value: (B, T, C). mask: None, (T, T) or (B, T, T) with 1 where
    attention is disallowed (additive * -1e9, as in the PyTorch module).
    Returns (B, T, C)."""
    B, T, C = query.shape
    # PyTorch: logits / sqrt(1/d_model)  ==  logits * sqrt(d_model)
    scale = math.sqrt(float(C))

    if tile_q is None:
        tile_q = min(T, 128)
    if tile_kv is None:
        tile_kv = min(T, 128)
    assert T % tile_q == 0 and T % tile_kv == 0

    has_mask = mask is not None

    in_specs = [
        pl.BlockSpec((None, tile_q, C), lambda b, qi, ki: (b, qi, 0)),   # q
        pl.BlockSpec((None, tile_kv, C), lambda b, qi, ki: (b, ki, 0)),  # k
        pl.BlockSpec((None, tile_kv, C), lambda b, qi, ki: (b, ki, 0)),  # v
    ]
    args = [query, key, value]

    if has_mask:
        mask = jnp.asarray(mask, jnp.float32)
        if mask.ndim == 2:
            mask = mask[None]                                  # (1, T, T)
        elif mask.ndim != 3:
            raise ValueError("mask must be rank 2 (T, T) or rank 3 (B, T, T)")
        if mask.shape[0] == 1:
            mask_idx = lambda b, qi, ki: (0, qi, ki)
        else:
            assert mask.shape[0] == B
            mask_idx = lambda b, qi, ki: (b, qi, ki)
        in_specs.append(pl.BlockSpec((None, tile_q, tile_kv), mask_idx))
        args.append(mask)

    kernel = functools.partial(_attn_kernel, scale=scale, has_mask=has_mask)
    grid = (B, T // tile_q, T // tile_kv)

    return pl.pallas_call(
        kernel,
        out_shape=jax.ShapeDtypeStruct((B, T, C), query.dtype),
        grid_spec=pltpu.PrefetchScalarGridSpec(
            num_scalar_prefetch=0,
            grid=grid,
            in_specs=in_specs,
            out_specs=pl.BlockSpec((None, tile_q, C),
                                   lambda b, qi, ki: (b, qi, 0)),
            scratch_shapes=[
                pltpu.VMEM((tile_q, 1), jnp.float32),    # running max m
                pltpu.VMEM((tile_q, 1), jnp.float32),    # running denom l
                pltpu.VMEM((tile_q, C), jnp.float32),    # running numerator
            ],
        ),
        compiler_params=pltpu.CompilerParams(
            dimension_semantics=("parallel", "parallel", "arbitrary"),
            vmem_limit_bytes=vmem_limit_bytes),
    )(*args)


def attention_reference(query, key, value, mask=None):
    """Pure-JAX mirror of the PyTorch forward (is_use_rope=False)."""
    d_model = query.shape[-1]
    dk = jnp.sqrt(jnp.float32(1.0 / d_model))
    logits = jnp.einsum('btc,bsc->bts', query, key,
                        precision=jax.lax.Precision.HIGHEST) / dk
    if mask is not None:
        logits = logits + jnp.asarray(mask, jnp.float32) * (-1e9)
    score = jax.nn.softmax(logits, axis=-1)
    return jnp.einsum('bts,bsc->btc', score, value,
                      precision=jax.lax.Precision.HIGHEST)


if __name__ == "__main__":
    B, T, d_model = 2, 8, 32

    key0 = jax.random.PRNGKey(0)
    kq, kk, kv_ = jax.random.split(key0, 3)
    q = 0.5 * jax.random.normal(kq, (B, T, d_model), jnp.float32)
    k = 0.5 * jax.random.normal(kk, (B, T, d_model), jnp.float32)
    v = jax.random.normal(kv_, (B, T, d_model), jnp.float32)

    # --- no-mask path (module's default call) ---
    y = jax.block_until_ready(attention(q, k, v))
    y_ref = attention_reference(q, k, v)
    assert y.shape == (B, T, d_model)
    assert jnp.allclose(y, y_ref, atol=2e-3, rtol=2e-3), "mismatch (no mask)"

    # --- masked path (causal mask: 1 where attention is disallowed) ---
    causal = 1.0 - jnp.tril(jnp.ones((T, T), jnp.float32))
    ym = jax.block_until_ready(attention(q, k, v, causal))
    ym_ref = attention_reference(q, k, v, causal)
    assert jnp.allclose(ym, ym_ref, atol=2e-3, rtol=2e-3), "mismatch (masked)"

    print("KERNEL_OK")
</pallas_src>

<mosaic_0001>
module attributes {stable_mosaic.version = 11 : i64} {
  func.func @_attn_kernel(%arg0: i32, %arg1: i32, %arg2: i32, %arg3: memref<1x8x32xf32, #tpu.memory_space<vmem>>, %arg4: memref<1x8x32xf32, #tpu.memory_space<vmem>>, %arg5: memref<1x8x32xf32, #tpu.memory_space<vmem>>, %arg6: memref<1x8x32xf32, #tpu.memory_space<vmem>>, %arg7: memref<8x1xf32, #tpu.memory_space<vmem>>, %arg8: memref<8x1xf32, #tpu.memory_space<vmem>>, %arg9: memref<8x32xf32, #tpu.memory_space<vmem>>) attributes {dimension_semantics = [#tpu.dimension_semantics<parallel>, #tpu.dimension_semantics<parallel>, #tpu.dimension_semantics<arbitrary>], iteration_bounds = array<i64: 2, 1, 1>, scalar_prefetch = 0 : i64, scratch_operands = 3 : i64, tpu.core_type = #tpu.core_type<tc>, window_params = [{transform_indices = @transform_0, window_bounds = array<i64: 1, 8, 32>}, {transform_indices = @transform_1, window_bounds = array<i64: 1, 8, 32>}, {transform_indices = @transform_2, window_bounds = array<i64: 1, 8, 32>}, {transform_indices = @transform_3, window_bounds = array<i64: 1, 8, 32>}]} {
    %c0_i32 = arith.constant 0 : i32
    %0 = arith.cmpi eq, %arg2, %c0_i32 : i32
    %1 = arith.extui %0 : i1 to i32
    %c0_i32_0 = arith.constant 0 : i32
    %2 = arith.cmpi ne, %1, %c0_i32_0 : i32
    scf.if %2 {
      %cst_27 = arith.constant 0xFF800000 : f32
      %37 = vector.broadcast %cst_27 : f32 to vector<8x1xf32>
      %c0_28 = arith.constant 0 : index
      %c0_29 = arith.constant 0 : index
      %38 = vector.load %arg7[%c0_28, %c0_29] : memref<8x1xf32, #tpu.memory_space<vmem>>, vector<8x1xf32>
      tpu.vector_store %arg7[%c0_28, %c0_29], %37 {strides = array<i32>} : memref<8x1xf32, #tpu.memory_space<vmem>>, vector<8x1xf32>,
      %cst_30 = arith.constant 0.000000e+00 : f32
      %39 = vector.broadcast %cst_30 : f32 to vector<8x1xf32>
      %c0_31 = arith.constant 0 : index
      %c0_32 = arith.constant 0 : index
      %40 = vector.load %arg8[%c0_31, %c0_32] : memref<8x1xf32, #tpu.memory_space<vmem>>, vector<8x1xf32>
      tpu.vector_store %arg8[%c0_31, %c0_32], %39 {strides = array<i32>} : memref<8x1xf32, #tpu.memory_space<vmem>>, vector<8x1xf32>,
      %cst_33 = arith.constant 0.000000e+00 : f32
      %41 = vector.broadcast %cst_33 : f32 to vector<8x32xf32>
      %c0_34 = arith.constant 0 : index
      %c0_35 = arith.constant 0 : index
      %42 = vector.load %arg9[%c0_34, %c0_35] : memref<8x32xf32, #tpu.memory_space<vmem>>, vector<8x32xf32>
      tpu.vector_store %arg9[%c0_34, %c0_35], %41 {strides = array<i32>} : memref<8x32xf32, #tpu.memory_space<vmem>>, vector<8x32xf32>,
    } else {
    }
    %c0 = arith.constant 0 : index
    %c0_1 = arith.constant 0 : index
    %c0_2 = arith.constant 0 : index
    %3 = vector.load %arg3[%c0, %c0_1, %c0_2] : memref<1x8x32xf32, #tpu.memory_space<vmem>>, vector<1x8x32xf32>
    %4 = vector.shape_cast %3 : vector<1x8x32xf32> to vector<8x32xf32>
    %c0_3 = arith.constant 0 : index
    %c0_4 = arith.constant 0 : index
    %c0_5 = arith.constant 0 : index
    %5 = vector.load %arg4[%c0_3, %c0_4, %c0_5] : memref<1x8x32xf32, #tpu.memory_space<vmem>>, vector<1x8x32xf32>
    %6 = vector.shape_cast %5 : vector<1x8x32xf32> to vector<8x32xf32>
    %cst = arith.constant dense<0.000000e+00> : vector<8x8xf32>
    %7 = tpu.matmul %4, %6, %cst {dimension_numbers = #tpu.dot_dimension_numbers<[1], [1], [0], [0], [0, 0, 1, 0], [], []>, precision = #tpu.contract_precision<fp32>} : vector<8x32xf32>, vector<8x32xf32>, vector<8x8xf32> -> vector<8x8xf32>
    %cst_6 = arith.constant 5.65685415 : f32
    %8 = vector.broadcast %cst_6 : f32 to vector<8x8xf32>
    %9 = arith.mulf %7, %8 : vector<8x8xf32>
    %c0_7 = arith.constant 0 : index
    %c0_8 = arith.constant 0 : index
    %10 = vector.load %arg7[%c0_7, %c0_8] : memref<8x1xf32, #tpu.memory_space<vmem>>, vector<8x1xf32>
    %cst_9 = arith.constant dense<0xFF800000> : vector<8xf32>
    %11 = vector.multi_reduction <maximumf>, %9, %cst_9 [1] : vector<8x8xf32> to vector<8xf32>
    %12 = vector.shape_cast %11 : vector<8xf32> to vector<8x1xf32>
    %13 = arith.maximumf %10, %12 : vector<8x1xf32>
    %14 = arith.subf %10, %13 : vector<8x1xf32>
    %15 = math.exp %14 : vector<8x1xf32>
    %16 = vector.broadcast %13 : vector<8x1xf32> to vector<8x8xf32>
    %17 = arith.subf %9, %16 : vector<8x8xf32>
    %18 = math.exp %17 : vector<8x8xf32>
    %c0_10 = arith.constant 0 : index
    %c0_11 = arith.constant 0 : index
    %19 = vector.load %arg8[%c0_10, %c0_11] : memref<8x1xf32, #tpu.memory_space<vmem>>, vector<8x1xf32>
    %20 = arith.mulf %15, %19 : vector<8x1xf32>
    %cst_12 = arith.constant dense<0.000000e+00> : vector<8xf32>
    %21 = vector.multi_reduction <add>, %18, %cst_12 [1] : vector<8x8xf32> to vector<8xf32>
    %22 = vector.shape_cast %21 : vector<8xf32> to vector<8x1xf32>
    %23 = arith.addf %20, %22 : vector<8x1xf32>
    %c0_13 = arith.constant 0 : index
    %c0_14 = arith.constant 0 : index
    %24 = vector.load %arg8[%c0_13, %c0_14] : memref<8x1xf32, #tpu.memory_space<vmem>>, vector<8x1xf32>
    tpu.vector_store %arg8[%c0_13, %c0_14], %23 {strides = array<i32>} : memref<8x1xf32, #tpu.memory_space<vmem>>, vector<8x1xf32>,
    %c0_15 = arith.constant 0 : index
    %c0_16 = arith.constant 0 : index
    %25 = vector.load %arg9[%c0_15, %c0_16] : memref<8x32xf32, #tpu.memory_space<vmem>>, vector<8x32xf32>
    %26 = vector.broadcast %15 : vector<8x1xf32> to vector<8x32xf32>
    %27 = arith.mulf %26, %25 : vector<8x32xf32>
    %c0_17 = arith.constant 0 : index
    %c0_18 = arith.constant 0 : index
    %c0_19 = arith.constant 0 : index
    %28 = vector.load %arg5[%c0_17, %c0_18, %c0_19] : memref<1x8x32xf32, #tpu.memory_space<vmem>>, vector<1x8x32xf32>
    %29 = vector.shape_cast %28 : vector<1x8x32xf32> to vector<8x32xf32>
    %cst_20 = arith.constant dense<0.000000e+00> : vector<8x32xf32>
    %30 = tpu.matmul %18, %29, %cst_20 {dimension_numbers = #tpu.dot_dimension_numbers<[1], [0], [0], [1], [0, 0, 1, 1], [], []>, precision = #tpu.contract_precision<fp32>} : vector<8x8xf32>, vector<8x32xf32>, vector<8x32xf32> -> vector<8x32xf32>
    %31 = arith.addf %27, %30 : vector<8x32xf32>
    %c0_21 = arith.constant 0 : index
    %c0_22 = arith.constant 0 : index
    %32 = vector.load %arg9[%c0_21, %c0_22] : memref<8x32xf32, #tpu.memory_space<vmem>>, vector<8x32xf32>
    tpu.vector_store %arg9[%c0_21, %c0_22], %31 {strides = array<i32>} : memref<8x32xf32, #tpu.memory_space<vmem>>, vector<8x32xf32>,
    %c0_23 = arith.constant 0 : index
    %c0_24 = arith.constant 0 : index
    %33 = vector.load %arg7[%c0_23, %c0_24] : memref<8x1xf32, #tpu.memory_space<vmem>>, vector<8x1xf32>
    tpu.vector_store %arg7[%c0_23, %c0_24], %13 {strides = array<i32>} : memref<8x1xf32, #tpu.memory_space<vmem>>, vector<8x1xf32>,
    %c0_i32_25 = arith.constant 0 : i32
    %34 = arith.cmpi eq, %arg2, %c0_i32_25 : i32
    %35 = arith.extui %34 : i1 to i32
    %c0_i32_26 = arith.constant 0 : i32
    %36 = arith.cmpi ne, %35, %c0_i32_26 : i32
    scf.if %36 {
      %c0_27 = arith.constant 0 : index
      %c0_28 = arith.constant 0 : index
      %37 = vector.load %arg8[%c0_27, %c0_28] : memref<8x1xf32, #tpu.memory_space<vmem>>, vector<8x1xf32>
      %38 = tpu.reciprocal %37 : vector<8x1xf32> -> vector<8x1xf32>
      %c0_29 = arith.constant 0 : index
      %c0_30 = arith.constant 0 : index
      %39 = vector.load %arg9[%c0_29, %c0_30] : memref<8x32xf32, #tpu.memory_space<vmem>>, vector<8x32xf32>
      %40 = vector.broadcast %38 : vector<8x1xf32> to vector<8x32xf32>
      %41 = arith.mulf %39, %40 : vector<8x32xf32>
      %c0_31 = arith.constant 0 : index
      %c0_32 = arith.constant 0 : index
      %c0_33 = arith.constant 0 : index
      %42 = vector.load %arg6[%c0_31, %c0_32, %c0_33] : memref<1x8x32xf32, #tpu.memory_space<vmem>>, vector<1x8x32xf32>
      %43 = vector.shape_cast %42 : vector<1x8x32xf32> to vector<8x32xf32>
      %44 = vector.shape_cast %41 : vector<8x32xf32> to vector<1x8x32xf32>
      tpu.vector_store %arg6[%c0_31, %c0_32, %c0_33], %44 {strides = array<i32>} : memref<1x8x32xf32, #tpu.memory_space<vmem>>, vector<1x8x32xf32>,
    } else {
    }
    return
  }
  func.func @transform_0(%arg0: i32, %arg1: i32, %arg2: i32) -> (i32, i32, i32) {
    %c0_i32 = arith.constant 0 : i32
    %c0_i32_0 = arith.constant 0 : i32
    return %arg0, %arg1, %c0_i32 : i32, i32, i32
  }
  func.func @transform_1(%arg0: i32, %arg1: i32, %arg2: i32) -> (i32, i32, i32) {
    %c0_i32 = arith.constant 0 : i32
    %c0_i32_0 = arith.constant 0 : i32
    return %arg0, %arg2, %c0_i32 : i32, i32, i32
  }
  func.func @transform_2(%arg0: i32, %arg1: i32, %arg2: i32) -> (i32, i32, i32) {
    %c0_i32 = arith.constant 0 : i32
    %c0_i32_0 = arith.constant 0 : i32
    return %arg0, %arg2, %c0_i32 : i32, i32, i32
  }
  func.func @transform_3(%arg0: i32, %arg1: i32, %arg2: i32) -> (i32, i32, i32) {
    %c0_i32 = arith.constant 0 : i32
    %c0_i32_0 = arith.constant 0 : i32
    return %arg0, %arg1, %c0_i32 : i32, i32, i32
  }
}

</mosaic_0001>

<llo_original>
// kernel: tpu_custom_call.1
$region0: #{tpu_custom_call.1}
  #allocation0 [shape = 'u32[]', space=smem, size = 0x4, offset = 0x4, fixed_abs, tag = 'smem constant byte address 0x4 - core index']
  #allocation1 [shape = 'u32[144,128]{1,0:T(1,128)}', space=vmem, size = 0x12000, scoped, tag = 'internal scratch']
  #allocation2 [shape = 'f32[8,1]{1,0:T(8,128)}', space=vmem, size = 0x1000, scoped, tag = 'scratch operand']
  #allocation3 [shape = 'f32[8,1]{1,0:T(8,128)}', space=vmem, size = 0x1000, scoped, tag = 'scratch operand']
  #allocation4 [shape = 'f32[8,32]{1,0:T(8,128)}', space=vmem, size = 0x1000, scoped, tag = 'scratch operand']
  %s0 = inlined_call_operand.hbm [shape: f32[2,8,32], index: 0, kind: input, shape index: {}]
  %s1 = inlined_call_operand.hbm [shape: f32[2,8,32], index: 1, kind: input, shape index: {}]
  %s2 = inlined_call_operand.hbm [shape: f32[2,8,32], index: 2, kind: input, shape index: {}]
  %s3 = inlined_call_operand.hbm [shape: f32[2,8,32], index: 3, kind: output, shape index: {}]
  %s4 = sld [smem:[#allocation0]]
  $region65: #{tpu_custom_call.1} parent=0
    _
  %s6 = ssub.s32 1, %s4
  %s7 = scalar_select 0, %s6, %s4
  $region1: #{tpu_custom_call.1} parent=0
    #allocation5 [shape = 'u8[8192]{0}', space=vmem, size = 0x2000, scoped, tag = 'input window, operand 0']
    #allocation6 [shape = 's32[2]{0}', space=sflag, size = 0x8, scoped, tag = 'scoped memory for tpu_custom_call.1']
    #allocation7 [shape = 's32[2]{0}', space=sflag, size = 0x8, scoped, tag = 'scoped memory for tpu_custom_call.1']
    #allocation8 [shape = 'u8[8192]{0}', space=vmem, size = 0x2000, scoped, tag = 'input window, operand 1']
    #allocation9 [shape = 's32[2]{0}', space=sflag, size = 0x8, scoped, tag = 'scoped memory for tpu_custom_call.1']
    #allocation10 [shape = 'u8[8192]{0}', space=vmem, size = 0x2000, scoped, tag = 'input window, operand 2']
    #allocation11 [shape = 'u8[8192]{0}', space=vmem, size = 0x2000, scoped, tag = 'output window, operand 0']
    %8 = vsyncpa [#allocation6], 0
    %s9 = scalar_lea.sflag [#allocation6], 1
    %10 = vsyncpa %s9, 0
    %11 = vsyncpa [#allocation9], 0
    %s12 = scalar_lea.sflag [#allocation9], 1
    %13 = vsyncpa %s12, 0
    %14 = vsyncpa [#allocation7], 0
    %s15 = scalar_lea.sflag [#allocation7], 1
    %16 = vsyncpa %s15, 0
    loop: start=0, step=1, limit=4
    $region2: #{tpu_custom_call.1} parent=1 // loop_pre_header
      _
    $region3: #{tpu_custom_call.1} parent=1 // loop_header
      %s18 = sphi 0, %s22
      %p19 = scmp.ge.s32.totalorder %s18, 4
      %s25 = sphi 0, %s44
      %s26 = sphi 0, %s40
      %s27 = sphi 0, %s36
      %s28 = sphi 0, %s25
      %s29 = sphi 0, %s26
      %s30 = sphi 0, %s27
      %s31 = sphi 0, %s28
      %s32 = sphi 0, %s29
      %s33 = sphi 0, %s30
      %s49 = sphi 0, %s51
      %s52 = sphi 0, %s49
      %s53 = sphi 0, %s52
      %s69 = sphi 0, %s53
      %s77 = sphi 0, %s79
      %s80 = sphi 0, %s77
      %s81 = sphi 0, %s80
      %s97 = sphi 0, %s81
      %s105 = sphi 0, %s107
      %s108 = sphi 0, %s105
      %s109 = sphi 0, %s108
      %s125 = sphi 0, %s109
      %s133 = sphi 0, %s135
      %s136 = sphi 0, %s133
      %s137 = sphi 0, %s136
      %s153 = sphi 0, %s137
    $region4: #{tpu_custom_call.1} parent=1 // loop_header_branch
      %21 = sbr.rel (%p19) target = $region8
    $region5: #{tpu_custom_call.1} parent=1 // loop_body
      %s23 = ssub.s32 %s18, 1
      %s24 = ssub.s32 %s18, 2
      %s34 = sadd.s32 1, %s27
      %p35 = scmp.ge.s32.totalorder %s34, 1
      %s36 = scalar_select %p35, 0, %s34
      %s37 = sadd.s32 1, %s26
      %s38 = scalar_select %p35, %s37, %s26
      %p39 = scmp.ge.s32.totalorder %s38, 1
      %s40 = scalar_select %p39, 0, %s38
      %s41 = sadd.s32 1, %s25
      %s42 = scalar_select %p39, %s41, %s25
      %p43 = scmp.ge.s32.totalorder %s42, 2
      %s44 = scalar_select %p43, 0, %s42
      %s45 = ssub.s32 %s25, %s44
      %s46 = ssub.s32 %s26, %s40
      %s47 = sor.u32 %s45, %s46
      %p48 = scmp.eq.s32.totalorder %s47, 0
      %s50 = sadd.s32 %s49, 1
      %s51 = scalar_select %p48, %s49, %s50
      %p54 = pneg %p48
      %p55 = scmp.eq.s32.totalorder %s18, 1
      %p56 = por %p54, %p55
      %p57 = scmp.ne.s32.totalorder %s49, %s52
      %p58 = scmp.eq.s32.totalorder %s18, 0
      %p59 = por %p57, %p58
      %p60 = scmp.ne.s32.totalorder %s49, %s52
      %p61 = scmp.eq.s32.totalorder %s23, 1
      %p62 = por %p60, %p61
      %p63 = scmp.ne.s32.totalorder %s52, %s53
      %p64 = scmp.eq.s32.totalorder %s23, 0
      %p65 = por %p63, %p64
      %p66 = scmp.ne.s32.totalorder %s52, %s53
      %p67 = scmp.eq.s32.totalorder %s24, 1
      %p68 = por %p66, %p67
      %p70 = scmp.ne.s32.totalorder %s53, %s69
      %p71 = scmp.eq.s32.totalorder %s24, 0
      %p72 = por %p70, %p71
      %s73 = ssub.s32 %s25, %s44
      %s74 = ssub.s32 %s27, %s36
      %s75 = sor.u32 %s73, %s74
      %p76 = scmp.eq.s32.totalorder %s75, 0
      %s78 = sadd.s32 %s77, 1
      %s79 = scalar_select %p76, %s77, %s78
      %p82 = pneg %p76
      %p83 = scmp.eq.s32.totalorder %s18, 1
      %p84 = por %p82, %p83
      %p85 = scmp.ne.s32.totalorder %s77, %s80
      %p86 = scmp.eq.s32.totalorder %s18, 0
      %p87 = por %p85, %p86
      %p88 = scmp.ne.s32.totalorder %s77, %s80
      %p89 = scmp.eq.s32.totalorder %s23, 1
      %p90 = por %p88, %p89
      %p91 = scmp.ne.s32.totalorder %s80, %s81
      %p92 = scmp.eq.s32.totalorder %s23, 0
      %p93 = por %p91, %p92
      %p94 = scmp.ne.s32.totalorder %s80, %s81
      %p95 = scmp.eq.s32.totalorder %s24, 1
      %p96 = por %p94, %p95
      %p98 = scmp.ne.s32.totalorder %s81, %s97
      %p99 = scmp.eq.s32.totalorder %s24, 0
      %p100 = por %p98, %p99
      %s101 = ssub.s32 %s25, %s44
      %s102 = ssub.s32 %s27, %s36
      %s103 = sor.u32 %s101, %s102
      %p104 = scmp.eq.s32.totalorder %s103, 0
      %s106 = sadd.s32 %s105, 1
      %s107 = scalar_select %p104, %s105, %s106
      %p110 = pneg %p104
      %p111 = scmp.eq.s32.totalorder %s18, 1
      %p112 = por %p110, %p111
      %p113 = scmp.ne.s32.totalorder %s105, %s108
      %p114 = scmp.eq.s32.totalorder %s18, 0
      %p115 = por %p113, %p114
      %p116 = scmp.ne.s32.totalorder %s105, %s108
      %p117 = scmp.eq.s32.totalorder %s23, 1
      %p118 = por %p116, %p117
      %p119 = scmp.ne.s32.totalorder %s108, %s109
      %p120 = scmp.eq.s32.totalorder %s23, 0
      %p121 = por %p119, %p120
      %p122 = scmp.ne.s32.totalorder %s108, %s109
      %p123 = scmp.eq.s32.totalorder %s24, 1
      %p124 = por %p122, %p123
      %p126 = scmp.ne.s32.totalorder %s109, %s125
      %p127 = scmp.eq.s32.totalorder %s24, 0
      %p128 = por %p126, %p127
      %s129 = ssub.s32 %s25, %s44
      %s130 = ssub.s32 %s26, %s40
      %s131 = sor.u32 %s129, %s130
      %p132 = scmp.eq.s32.totalorder %s131, 0
      %s134 = sadd.s32 %s133, 1
      %s135 = scalar_select %p132, %s133, %s134
      %p138 = pneg %p132
      %p139 = scmp.eq.s32.totalorder %s18, 1
      %p140 = por %p138, %p139
      %p141 = scmp.ne.s32.totalorder %s133, %s136
      %p142 = scmp.eq.s32.totalorder %s18, 0
      %p143 = por %p141, %p142
      %p144 = scmp.ne.s32.totalorder %s133, %s136
      %p145 = scmp.eq.s32.totalorder %s23, 1
      %p146 = por %p144, %p145
      %p147 = scmp.ne.s32.totalorder %s136, %s137
      %p148 = scmp.eq.s32.totalorder %s23, 0
      %p149 = por %p147, %p148
      %p150 = scmp.ne.s32.totalorder %s136, %s137
      %p151 = scmp.eq.s32.totalorder %s24, 1
      %p152 = por %p150, %p151
      %p154 = scmp.ne.s32.totalorder %s137, %s153
      %p155 = scmp.eq.s32.totalorder %s24, 0
      %p156 = por %p154, %p155
      %p157 = scmp.le.s32.totalorder 1, %s18
      %p158 = scmp.lt.s32.totalorder %s18, 3
      %p159 = pnand %p157, %p158
      %p160 = pneg %p159
      // Predicated region
      $region9: #{tpu_custom_call.1} parent=5 // pred_check
        _
      $region10: #{tpu_custom_call.1} parent=5 // pred_check_branch
        %162 = sbr.rel (%p159) target = $region12
      $region11: #{tpu_custom_call.1} parent=5 // pred_region
        %s163 = ssub.s32 %s18, 1
      $region12: #{tpu_custom_call.1} parent=5 // pred_fallthru
        _
      %p164 = scmp.lt.s32.totalorder %s18, 2
      // Predicated region
      $region13: #{tpu_custom_call.1} parent=5 // pred_check
        %p165 = pneg %p164
      $region14: #{tpu_custom_call.1} parent=5 // pred_check_branch
        %167 = sbr.rel (%p165) target = $region16
      $region15: #{tpu_custom_call.1} parent=5 // pred_region
        // Predicated region
        $region17: #{tpu_custom_call.1} parent=15 // pred_check
          %p168 = pneg %p59
        $region18: #{tpu_custom_call.1} parent=15 // pred_check_branch
          %170 = sbr.rel (%p168) target = $region20
        $region19: #{tpu_custom_call.1} parent=15 // pred_region
          %s171 = sand.u32 %s49, 1
          %s172 = scalar_lea.sflag [#allocation6], %s171
          %s173 = sand.u32 %s49, 1
          %s174 = smul.addr %s173, 8
          %s175 = scalar_lea.vmem [#allocation5], %s174
          %s177 = ssub.s32 128, 128
          %178 = vsyncadd %s172, %s177
          %s179 = sadd.s32 %s26, %s25
          %s180 = smul.addr %s179, 128
          %s181 = scalar_lea.hbm %s0, %s180
          %s183 = sshll.u32 %s175, 4
          %s184 = int_to_ptr.vmem [resolvable:$true] %s183
          %186 = dma.hbm_to_vmem [thread:$0]  %s181, 128, %s184, %s172
        $region20: #{tpu_custom_call.1} parent=15 // pred_fallthru
          _
        // Predicated region
        $region21: #{tpu_custom_call.1} parent=15 // pred_check
          %p187 = pneg %p87
        $region22: #{tpu_custom_call.1} parent=15 // pred_check_branch
          %189 = sbr.rel (%p187) target = $region24
        $region23: #{tpu_custom_call.1} parent=15 // pred_region
          %s190 = sand.u32 %s18, 1
          %s191 = scalar_lea.sflag [#allocation9], %s190
          %s192 = sand.u32 %s77, 1
          %s193 = smul.addr %s192, 8
          %s194 = scalar_lea.vmem [#allocation8], %s193
          %s196 = ssub.s32 128, 128
          %197 = vsyncadd %s191, %s196
          %s198 = sadd.s32 %s27, %s25
          %s199 = smul.addr %s198, 128
          %s200 = scalar_lea.hbm %s1, %s199
          %s202 = sshll.u32 %s194, 4
          %s203 = int_to_ptr.vmem [resolvable:$true] %s202
          %205 = dma.hbm_to_vmem [thread:$0]  %s200, 128, %s203, %s191
        $region24: #{tpu_custom_call.1} parent=15 // pred_fallthru
          _
        // Predicated region
        $region25: #{tpu_custom_call.1} parent=15 // pred_check
          %p206 = pneg %p115
        $region26: #{tpu_custom_call.1} parent=15 // pred_check_branch
          %208 = sbr.rel (%p206) target = $region28
        $region27: #{tpu_custom_call.1} parent=15 // pred_region
          %s209 = sand.u32 %s18, 1
          %s210 = scalar_lea.sflag [#allocation9], %s209
          %s211 = sand.u32 %s105, 1
          %s212 = smul.addr %s211, 8
          %s213 = scalar_lea.vmem [#allocation10], %s212
          %s215 = ssub.s32 128, 128
          %216 = vsyncadd %s210, %s215
          %s217 = sadd.s32 %s27, %s25
          %s218 = smul.addr %s217, 128
          %s219 = scalar_lea.hbm %s2, %s218
          %s221 = sshll.u32 %s213, 4
          %s222 = int_to_ptr.vmem [resolvable:$true] %s221
          %224 = dma.hbm_to_vmem [thread:$0]  %s219, 128, %s222, %s210
        $region28: #{tpu_custom_call.1} parent=15 // pred_fallthru
          _
      $region16: #{tpu_custom_call.1} parent=5 // pred_fallthru
        _
      %p225 = scmp.le.s32.totalorder 1, %s18
      %p226 = scmp.lt.s32.totalorder %s18, 3
      %p227 = pnand %p225, %p226
      %p228 = pneg %p227
      // Predicated region
      $region29: #{tpu_custom_call.1} parent=5 // pred_check
        _
      $region30: #{tpu_custom_call.1} parent=5 // pred_check_branch
        %230 = sbr.rel (%p227) target = $region32
      $region31: #{tpu_custom_call.1} parent=5 // pred_region
        %s231 = ssub.s32 %s18, 1
        %s232 = sand.u32 %s52, 1
        %s233 = scalar_lea.sflag [#allocation6], %s232
        %s234 = sand.u32 %s52, 1
        %s235 = smul.addr %s234, 8
        %s236 = scalar_lea.vmem [#allocation5], %s235
        // Predicated region
        $region33: #{tpu_custom_call.1} parent=31 // pred_check
          %p237 = pneg %p65
        $region34: #{tpu_custom_call.1} parent=31 // pred_check_branch
          %239 = sbr.rel (%p237) target = $region36
        $region35: #{tpu_custom_call.1} parent=31 // pred_region
          %240 = dma.done %s233, 128
        $region36: #{tpu_custom_call.1} parent=31 // pred_fallthru
          _
        %s241 = sand.u32 %s23, 1
        %s242 = scalar_lea.sflag [#allocation9], %s241
        %s243 = sand.u32 %s80, 1
        %s244 = smul.addr %s243, 8
        %s245 = scalar_lea.vmem [#allocation8], %s244
        // Predicated region
        $region37: #{tpu_custom_call.1} parent=31 // pred_check
          %p246 = pneg %p93
        $region38: #{tpu_custom_call.1} parent=31 // pred_check_branch
          %248 = sbr.rel (%p246) target = $region40
        $region39: #{tpu_custom_call.1} parent=31 // pred_region
          %249 = dma.done %s242, 128
        $region40: #{tpu_custom_call.1} parent=31 // pred_fallthru
          _
        %s250 = sand.u32 %s23, 1
        %s251 = scalar_lea.sflag [#allocation9], %s250
        %s252 = sand.u32 %s108, 1
        %s253 = smul.addr %s252, 8
        %s254 = scalar_lea.vmem [#allocation10], %s253
        // Predicated region
        $region41: #{tpu_custom_call.1} parent=31 // pred_check
          %p255 = pneg %p121
        $region42: #{tpu_custom_call.1} parent=31 // pred_check_branch
          %257 = sbr.rel (%p255) target = $region44
        $region43: #{tpu_custom_call.1} parent=31 // pred_region
          %258 = dma.done %s251, 128
        $region44: #{tpu_custom_call.1} parent=31 // pred_fallthru
          _
        %s259 = sand.u32 %s52, 1
        %s260 = scalar_lea.sflag [#allocation6], %s259
        %s261 = sand.u32 %s52, 1
        %s262 = smul.addr %s261, 8
        %s263 = scalar_lea.vmem [#allocation5], %s262
        %p264 = pneg %p65
        %p265 = pneg %p62
        %s266 = sand.u32 %s23, 1
        %s267 = scalar_lea.sflag [#allocation9], %s266
        %s268 = sand.u32 %s80, 1
        %s269 = smul.addr %s268, 8
        %s270 = scalar_lea.vmem [#allocation8], %s269
        %p271 = pneg %p93
        %p272 = pneg %p90
        %s273 = sand.u32 %s23, 1
        %s274 = scalar_lea.sflag [#allocation9], %s273
        %s275 = sand.u32 %s108, 1
        %s276 = smul.addr %s275, 8
        %s277 = scalar_lea.vmem [#allocation10], %s276
        %p278 = pneg %p121
        %p279 = pneg %p118
        %p280 = pneg %p149
        %p281 = pneg %p146
        %s282 = sand.u32 %s136, 1
        %s283 = scalar_lea.sflag [#allocation7], %s282
        %s284 = sand.u32 %s136, 1
        %s285 = smul.addr %s284, 8
        %s286 = scalar_lea.vmem [#allocation11], %s285
        %p287 = scmp.eq.s32.totalorder %s30, 0
        // Predicated region
        $region45: #{tpu_custom_call.1} parent=31 // pred_check
          %p288 = pneg %p287
        $region46: #{tpu_custom_call.1} parent=31 // pred_check_branch
          %290 = sbr.rel (%p288) target = $region48
        $region47: #{tpu_custom_call.1} parent=31 // pred_region
          %vm291 = vcmask 7168
          %292 = vst.msk [vmem:[#allocation2] sm:$0xff] %vm291, -inf
          %293 = vst.msk [vmem:[#allocation3] sm:$0xff] %vm291, 0.0
          %vm294 = vcmask 261120
          %295 = vst.msk [vmem:[#allocation4] sm:$0xff] %vm294, 0.0
        $region48: #{tpu_custom_call.1} parent=31 // pred_fallthru
          _
        %v296 = vld [vmem:[%s236] sm:$0xff]
        %v297 = vld [vmem:[%s245] sm:$0xff]
        %vm298 = vcmask 261120
        %v300 = vsel %vm298, %v296, 0
        %v303 = vsel %vm298, %v297, 0
        %305 = vmatprep.subr.mxu0 0.0
        %v306 = vand.u32 %v303, 4294901760
        %307 = vmatpush1.xpose.msra.mxu0 %v306
        %308 = vmatprep.subr.mxu0 0.0
        %309 = vmatpush1.xpose.msra.mxu0 0.0
        %310 = vmatprep.subr.mxu0 0.0
        %311 = vmatpush1.xpose.msra.mxu0 0.0
        %312 = vmatprep.subr.mxu0 0.0
        %313 = vmatpush1.xpose.msra.mxu0 0.0
        %314 = vmatprep.subr.mxu0 0.0
        %315 = vmatpush1.xpose.msra.mxu0 0.0
        %316 = vmatprep.subr.mxu0 0.0
        %317 = vmatpush1.xpose.msra.mxu0 0.0
        %318 = vmatprep.subr.mxu0 0.0
        %319 = vmatpush1.xpose.msra.mxu0 0.0
        %320 = vmatprep.subr.mxu0 0.0
        %321 = vmatpush1.xpose.msra.mxu0 0.0
        %322 = vmatprep.subr.mxu0 0.0
        %323 = vmatpush1.xpose.msra.mxu0 0.0
        %324 = vmatprep.subr.mxu0 0.0
        %325 = vmatpush1.xpose.msra.mxu0 0.0
        %326 = vmatprep.subr.mxu0 0.0
        %327 = vmatpush1.xpose.msra.mxu0 0.0
        %328 = vmatprep.subr.mxu0 0.0
        %329 = vmatpush1.xpose.msra.mxu0 0.0
        %330 = vmatprep.subr.mxu0 0.0
        %331 = vmatpush1.xpose.msra.mxu0 0.0
        %332 = vmatprep.subr.mxu0 0.0
        %333 = vmatpush1.xpose.msra.mxu0 0.0
        %334 = vmatprep.subr.mxu0 0.0
        %335 = vmatpush1.xpose.msra.mxu0 0.0
        %336 = vmatprep.subr.mxu0 0.0
        %337 = vmatpush1.xpose.msra.mxu0 0.0
        %338 = vmatprep.subr.mxu0 0.0
        %339 = vmatpush1.xpose.msra.mxu0 0.0
        %340 = vmatprep.subr.mxu0 0.0
        %341 = vmatpush1.xpose.msra.mxu0 0.0
        %342 = vmatprep.subr.mxu0 0.0
        %343 = vmatpush1.xpose.msra.mxu0 0.0
        %344 = vmatprep.subr.mxu0 0.0
        %345 = vmatpush1.xpose.msra.mxu0 0.0
        %346 = vmatprep.subr.mxu0 0.0
        %347 = vmatpush1.xpose.msra.mxu0 0.0
        %348 = vmatprep.subr.mxu0 0.0
        %349 = vmatpush1.xpose.msra.mxu0 0.0
        %350 = vmatprep.subr.mxu0 0.0
        %351 = vmatpush1.xpose.msra.mxu0 0.0
        %352 = vmatprep.subr.mxu0 0.0
        %353 = vmatpush1.xpose.msra.mxu0 0.0
        %354 = vmatprep.subr.mxu0 0.0
        %355 = vmatpush1.xpose.msra.mxu0 0.0
        %356 = vmatprep.subr.mxu0 0.0
        %357 = vmatpush1.xpose.msra.mxu0 0.0
        %358 = vmatprep.subr.mxu0 0.0
        %359 = vmatpush1.xpose.msra.mxu0 0.0
        %360 = vmatprep.subr.mxu0 0.0
        %361 = vmatpush1.xpose.msra.mxu0 0.0
        %362 = vmatprep.subr.mxu0 0.0
        %363 = vmatpush1.xpose.msra.mxu0 0.0
        %364 = vmatprep.subr.mxu0 0.0
        %365 = vmatpush1.xpose.msra.mxu0 0.0
        %366 = vmatprep.subr.mxu0 0.0
        %367 = vmatpush1.xpose.msra.mxu0 0.0
        %368 = vmatprep.subr.mxu0 0.0
        %369 = vmatpush1.xpose.msra.mxu0 0.0
        %370 = vmatprep.mubr.f32.mxu0 0.0
        %v371 = vand.u32 %v300, 4294901760
        %v372 = vsub.f32 %v300, %v371
        %v373 = vand.u32 %v372, 4294901760
        %v374 = vsub.f32 %v372, %v373
        %v375 = vand.u32 %v374, 4294901760
        %376 = vmatmul.mubr.f32.gmra.mrb[0].mxu0 %v375
        %v377 = vpop.f32.mrb[0].mxu0
        %v378 = vadd.f32 0.0, %v377
        %v379 = vpop.f32.mrb[0].mxu0
        %380 = vdwg.mxu0
        %381 = vmatprep.subr.mxu0 0.0
        %v382 = vand.u32 %v303, 4294901760
        %v383 = vsub.f32 %v303, %v382
        %v384 = vand.u32 %v383, 4294901760
        %v385 = vsub.f32 %v383, %v384
        %v386 = vand.u32 %v385, 4294901760
        %387 = vmatpush1.xpose.msra.mxu0 %v386
        %388 = vmatprep.subr.mxu0 0.0
        %389 = vmatpush1.xpose.msra.mxu0 0.0
        %390 = vmatprep.subr.mxu0 0.0
        %391 = vmatpush1.xpose.msra.mxu0 0.0
        %392 = vmatprep.subr.mxu0 0.0
        %393 = vmatpush1.xpose.msra.mxu0 0.0
        %394 = vmatprep.subr.mxu0 0.0
        %395 = vmatpush1.xpose.msra.mxu0 0.0
        %396 = vmatprep.subr.mxu0 0.0
        %397 = vmatpush1.xpose.msra.mxu0 0.0
        %398 = vmatprep.subr.mxu0 0.0
        %399 = vmatpush1.xpose.msra.mxu0 0.0
        %400 = vmatprep.subr.mxu0 0.0
        %401 = vmatpush1.xpose.msra.mxu0 0.0
        %402 = vmatprep.subr.mxu0 0.0
        %403 = vmatpush1.xpose.msra.mxu0 0.0
        %404 = vmatprep.subr.mxu0 0.0
        %405 = vmatpush1.xpose.msra.mxu0 0.0
        %406 = vmatprep.subr.mxu0 0.0
        %407 = vmatpush1.xpose.msra.mxu0 0.0
        %408 = vmatprep.subr.mxu0 0.0
        %409 = vmatpush1.xpose.msra.mxu0 0.0
        %410 = vmatprep.subr.mxu0 0.0
        %411 = vmatpush1.xpose.msra.mxu0 0.0
        %412 = vmatprep.subr.mxu0 0.0
        %413 = vmatpush1.xpose.msra.mxu0 0.0
        %414 = vmatprep.subr.mxu0 0.0
        %415 = vmatpush1.xpose.msra.mxu0 0.0
        %416 = vmatprep.subr.mxu0 0.0
        %417 = vmatpush1.xpose.msra.mxu0 0.0
        %418 = vmatprep.subr.mxu0 0.0
        %419 = vmatpush1.xpose.msra.mxu0 0.0
        %420 = vmatprep.subr.mxu0 0.0
        %421 = vmatpush1.xpose.msra.mxu0 0.0
        %422 = vmatprep.subr.mxu0 0.0
        %423 = vmatpush1.xpose.msra.mxu0 0.0
        %424 = vmatprep.subr.mxu0 0.0
        %425 = vmatpush1.xpose.msra.mxu0 0.0
        %426 = vmatprep.subr.mxu0 0.0
        %427 = vmatpush1.xpose.msra.mxu0 0.0
        %428 = vmatprep.subr.mxu0 0.0
        %429 = vmatpush1.xpose.msra.mxu0 0.0
        %430 = vmatprep.subr.mxu0 0.0
        %431 = vmatpush1.xpose.msra.mxu0 0.0
        %432 = vmatprep.subr.mxu0 0.0
        %433 = vmatpush1.xpose.msra.mxu0 0.0
        %434 = vmatprep.subr.mxu0 0.0
        %435 = vmatpush1.xpose.msra.mxu0 0.0
        %436 = vmatprep.subr.mxu0 0.0
        %437 = vmatpush1.xpose.msra.mxu0 0.0
        %438 = vmatprep.subr.mxu0 0.0
        %439 = vmatpush1.xpose.msra.mxu0 0.0
        %440 = vmatprep.subr.mxu0 0.0
        %441 = vmatpush1.xpose.msra.mxu0 0.0
        %442 = vmatprep.subr.mxu0 0.0
        %443 = vmatpush1.xpose.msra.mxu0 0.0
        %444 = vmatprep.subr.mxu0 0.0
        %445 = vmatpush1.xpose.msra.mxu0 0.0
        %446 = vmatprep.subr.mxu0 0.0
        %447 = vmatpush1.xpose.msra.mxu0 0.0
        %448 = vmatprep.subr.mxu0 0.0
        %449 = vmatpush1.xpose.msra.mxu0 0.0
        %450 = vmatprep.mubr.f32.mxu0 0.0
        %v451 = vand.u32 %v300, 4294901760
        %452 = vmatmul.mubr.f32.gmra.mrb[0].mxu0 %v451
        %v453 = vpop.f32.mrb[0].mxu0
        %v454 = vadd.f32 %v378, %v453
        %v455 = vpop.f32.mrb[0].mxu0
        %456 = vdwg.mxu0
        %457 = vmatprep.subr.mxu0 0.0
        %v458 = vand.u32 %v303, 4294901760
        %v459 = vsub.f32 %v303, %v458
        %460 = vmatpush1.xpose.msra.mxu0 %v459
        %461 = vmatprep.subr.mxu0 0.0
        %462 = vmatpush1.xpose.msra.mxu0 0.0
        %463 = vmatprep.subr.mxu0 0.0
        %464 = vmatpush1.xpose.msra.mxu0 0.0
        %465 = vmatprep.subr.mxu0 0.0
        %466 = vmatpush1.xpose.msra.mxu0 0.0
        %467 = vmatprep.subr.mxu0 0.0
        %468 = vmatpush1.xpose.msra.mxu0 0.0
        %469 = vmatprep.subr.mxu0 0.0
        %470 = vmatpush1.xpose.msra.mxu0 0.0
        %471 = vmatprep.subr.mxu0 0.0
        %472 = vmatpush1.xpose.msra.mxu0 0.0
        %473 = vmatprep.subr.mxu0 0.0
        %474 = vmatpush1.xpose.msra.mxu0 0.0
        %475 = vmatprep.subr.mxu0 0.0
        %476 = vmatpush1.xpose.msra.mxu0 0.0
        %477 = vmatprep.subr.mxu0 0.0
        %478 = vmatpush1.xpose.msra.mxu0 0.0
        %479 = vmatprep.subr.mxu0 0.0
        %480 = vmatpush1.xpose.msra.mxu0 0.0
        %481 = vmatprep.subr.mxu0 0.0
        %482 = vmatpush1.xpose.msra.mxu0 0.0
        %483 = vmatprep.subr.mxu0 0.0
        %484 = vmatpush1.xpose.msra.mxu0 0.0
        %485 = vmatprep.subr.mxu0 0.0
        %486 = vmatpush1.xpose.msra.mxu0 0.0
        %487 = vmatprep.subr.mxu0 0.0
        %488 = vmatpush1.xpose.msra.mxu0 0.0
        %489 = vmatprep.subr.mxu0 0.0
        %490 = vmatpush1.xpose.msra.mxu0 0.0
        %491 = vmatprep.subr.mxu0 0.0
        %492 = vmatpush1.xpose.msra.mxu0 0.0
        %493 = vmatprep.subr.mxu0 0.0
        %494 = vmatpush1.xpose.msra.mxu0 0.0
        %495 = vmatprep.subr.mxu0 0.0
        %496 = vmatpush1.xpose.msra.mxu0 0.0
        %497 = vmatprep.subr.mxu0 0.0
        %498 = vmatpush1.xpose.msra.mxu0 0.0
        %499 = vmatprep.subr.mxu0 0.0
        %500 = vmatpush1.xpose.msra.mxu0 0.0
        %501 = vmatprep.subr.mxu0 0.0
        %502 = vmatpush1.xpose.msra.mxu0 0.0
        %503 = vmatprep.subr.mxu0 0.0
        %504 = vmatpush1.xpose.msra.mxu0 0.0
        %505 = vmatprep.subr.mxu0 0.0
        %506 = vmatpush1.xpose.msra.mxu0 0.0
        %507 = vmatprep.subr.mxu0 0.0
        %508 = vmatpush1.xpose.msra.mxu0 0.0
        %509 = vmatprep.subr.mxu0 0.0
        %510 = vmatpush1.xpose.msra.mxu0 0.0
        %511 = vmatprep.subr.mxu0 0.0
        %512 = vmatpush1.xpose.msra.mxu0 0.0
        %513 = vmatprep.subr.mxu0 0.0
        %514 = vmatpush1.xpose.msra.mxu0 0.0
        %515 = vmatprep.subr.mxu0 0.0
        %516 = vmatpush1.xpose.msra.mxu0 0.0
        %517 = vmatprep.subr.mxu0 0.0
        %518 = vmatpush1.xpose.msra.mxu0 0.0
        %519 = vmatprep.subr.mxu0 0.0
        %520 = vmatpush1.xpose.msra.mxu0 0.0
        %521 = vmatprep.subr.mxu0 0.0
        %522 = vmatpush1.xpose.msra.mxu0 0.0
        %523 = vmatprep.mubr.f32.mxu0 0.0
        %v524 = vand.u32 %v300, 4294901760
        %v525 = vsub.f32 %v300, %v524
        %526 = vmatmul.mubr.f32.gmra.mrb[0].mxu0 %v525
        %v527 = vpop.f32.mrb[0].mxu0
        %v528 = vadd.f32 %v454, %v527
        %v529 = vpop.f32.mrb[0].mxu0
        %530 = vdwg.mxu0
        %531 = vmatprep.subr.mxu0 0.0
        %v532 = vand.u32 %v303, 4294901760
        %533 = vmatpush1.xpose.msra.mxu0 %v532
        %534 = vmatprep.subr.mxu0 0.0
        %535 = vmatpush1.xpose.msra.mxu0 0.0
        %536 = vmatprep.subr.mxu0 0.0
        %537 = vmatpush1.xpose.msra.mxu0 0.0
        %538 = vmatprep.subr.mxu0 0.0
        %539 = vmatpush1.xpose.msra.mxu0 0.0
        %540 = vmatprep.subr.mxu0 0.0
        %541 = vmatpush1.xpose.msra.mxu0 0.0
        %542 = vmatprep.subr.mxu0 0.0
        %543 = vmatpush1.xpose.msra.mxu0 0.0
        %544 = vmatprep.subr.mxu0 0.0
        %545 = vmatpush1.xpose.msra.mxu0 0.0
        %546 = vmatprep.subr.mxu0 0.0
        %547 = vmatpush1.xpose.msra.mxu0 0.0
        %548 = vmatprep.subr.mxu0 0.0
        %549 = vmatpush1.xpose.msra.mxu0 0.0
        %550 = vmatprep.subr.mxu0 0.0
        %551 = vmatpush1.xpose.msra.mxu0 0.0
        %552 = vmatprep.subr.mxu0 0.0
        %553 = vmatpush1.xpose.msra.mxu0 0.0
        %554 = vmatprep.subr.mxu0 0.0
        %555 = vmatpush1.xpose.msra.mxu0 0.0
        %556 = vmatprep.subr.mxu0 0.0
        %557 = vmatpush1.xpose.msra.mxu0 0.0
        %558 = vmatprep.subr.mxu0 0.0
        %559 = vmatpush1.xpose.msra.mxu0 0.0
        %560 = vmatprep.subr.mxu0 0.0
        %561 = vmatpush1.xpose.msra.mxu0 0.0
        %562 = vmatprep.subr.mxu0 0.0
        %563 = vmatpush1.xpose.msra.mxu0 0.0
        %564 = vmatprep.subr.mxu0 0.0
        %565 = vmatpush1.xpose.msra.mxu0 0.0
        %566 = vmatprep.subr.mxu0 0.0
        %567 = vmatpush1.xpose.msra.mxu0 0.0
        %568 = vmatprep.subr.mxu0 0.0
        %569 = vmatpush1.xpose.msra.mxu0 0.0
        %570 = vmatprep.subr.mxu0 0.0
        %571 = vmatpush1.xpose.msra.mxu0 0.0
        %572 = vmatprep.subr.mxu0 0.0
        %573 = vmatpush1.xpose.msra.mxu0 0.0
        %574 = vmatprep.subr.mxu0 0.0
        %575 = vmatpush1.xpose.msra.mxu0 0.0
        %576 = vmatprep.subr.mxu0 0.0
        %577 = vmatpush1.xpose.msra.mxu0 0.0
        %578 = vmatprep.subr.mxu0 0.0
        %579 = vmatpush1.xpose.msra.mxu0 0.0
        %580 = vmatprep.subr.mxu0 0.0
        %581 = vmatpush1.xpose.msra.mxu0 0.0
        %582 = vmatprep.subr.mxu0 0.0
        %583 = vmatpush1.xpose.msra.mxu0 0.0
        %584 = vmatprep.subr.mxu0 0.0
        %585 = vmatpush1.xpose.msra.mxu0 0.0
        %586 = vmatprep.subr.mxu0 0.0
        %587 = vmatpush1.xpose.msra.mxu0 0.0
        %588 = vmatprep.subr.mxu0 0.0
        %589 = vmatpush1.xpose.msra.mxu0 0.0
        %590 = vmatprep.subr.mxu0 0.0
        %591 = vmatpush1.xpose.msra.mxu0 0.0
        %592 = vmatprep.subr.mxu0 0.0
        %593 = vmatpush1.xpose.msra.mxu0 0.0
        %594 = vmatprep.subr.mxu0 0.0
        %595 = vmatpush1.xpose.msra.mxu0 0.0
        %596 = vmatprep.mubr.f32.mxu0 0.0
        %v597 = vand.u32 %v300, 4294901760
        %v598 = vsub.f32 %v300, %v597
        %v599 = vand.u32 %v598, 4294901760
        %600 = vmatmul.mubr.f32.gmra.mrb[0].mxu0 %v599
        %v601 = vpop.f32.mrb[0].mxu0
        %v602 = vadd.f32 %v528, %v601
        %v603 = vpop.f32.mrb[0].mxu0
        %604 = vdwg.mxu0
        %605 = vmatprep.subr.mxu0 0.0
        %v606 = vand.u32 %v303, 4294901760
        %v607 = vsub.f32 %v303, %v606
        %v608 = vand.u32 %v607, 4294901760
        %609 = vmatpush1.xpose.msra.mxu0 %v608
        %610 = vmatprep.subr.mxu0 0.0
        %611 = vmatpush1.xpose.msra.mxu0 0.0
        %612 = vmatprep.subr.mxu0 0.0
        %613 = vmatpush1.xpose.msra.mxu0 0.0
        %614 = vmatprep.subr.mxu0 0.0
        %615 = vmatpush1.xpose.msra.mxu0 0.0
        %616 = vmatprep.subr.mxu0 0.0
        %617 = vmatpush1.xpose.msra.mxu0 0.0
        %618 = vmatprep.subr.mxu0 0.0
        %619 = vmatpush1.xpose.msra.mxu0 0.0
        %620 = vmatprep.subr.mxu0 0.0
        %621 = vmatpush1.xpose.msra.mxu0 0.0
        %622 = vmatprep.subr.mxu0 0.0
        %623 = vmatpush1.xpose.msra.mxu0 0.0
        %624 = vmatprep.subr.mxu0 0.0
        %625 = vmatpush1.xpose.msra.mxu0 0.0
        %626 = vmatprep.subr.mxu0 0.0
        %627 = vmatpush1.xpose.msra.mxu0 0.0
        %628 = vmatprep.subr.mxu0 0.0
        %629 = vmatpush1.xpose.msra.mxu0 0.0
        %630 = vmatprep.subr.mxu0 0.0
        %631 = vmatpush1.xpose.msra.mxu0 0.0
        %632 = vmatprep.subr.mxu0 0.0
        %633 = vmatpush1.xpose.msra.mxu0 0.0
        %634 = vmatprep.subr.mxu0 0.0
        %635 = vmatpush1.xpose.msra.mxu0 0.0
        %636 = vmatprep.subr.mxu0 0.0
        %637 = vmatpush1.xpose.msra.mxu0 0.0
        %638 = vmatprep.subr.mxu0 0.0
        %639 = vmatpush1.xpose.msra.mxu0 0.0
        %640 = vmatprep.subr.mxu0 0.0
        %641 = vmatpush1.xpose.msra.mxu0 0.0
        %642 = vmatprep.subr.mxu0 0.0
        %643 = vmatpush1.xpose.msra.mxu0 0.0
        %644 = vmatprep.subr.mxu0 0.0
        %645 = vmatpush1.xpose.msra.mxu0 0.0
        %646 = vmatprep.subr.mxu0 0.0
        %647 = vmatpush1.xpose.msra.mxu0 0.0
        %648 = vmatprep.subr.mxu0 0.0
        %649 = vmatpush1.xpose.msra.mxu0 0.0
        %650 = vmatprep.subr.mxu0 0.0
        %651 = vmatpush1.xpose.msra.mxu0 0.0
        %652 = vmatprep.subr.mxu0 0.0
        %653 = vmatpush1.xpose.msra.mxu0 0.0
        %654 = vmatprep.subr.mxu0 0.0
        %655 = vmatpush1.xpose.msra.mxu0 0.0
        %656 = vmatprep.subr.mxu0 0.0
        %657 = vmatpush1.xpose.msra.mxu0 0.0
        %658 = vmatprep.subr.mxu0 0.0
        %659 = vmatpush1.xpose.msra.mxu0 0.0
        %660 = vmatprep.subr.mxu0 0.0
        %661 = vmatpush1.xpose.msra.mxu0 0.0
        %662 = vmatprep.subr.mxu0 0.0
        %663 = vmatpush1.xpose.msra.mxu0 0.0
        %664 = vmatprep.subr.mxu0 0.0
        %665 = vmatpush1.xpose.msra.mxu0 0.0
        %666 = vmatprep.subr.mxu0 0.0
        %667 = vmatpush1.xpose.msra.mxu0 0.0
        %668 = vmatprep.subr.mxu0 0.0
        %669 = vmatpush1.xpose.msra.mxu0 0.0
        %670 = vmatprep.subr.mxu0 0.0
        %671 = vmatpush1.xpose.msra.mxu0 0.0
        %672 = vmatprep.mubr.f32.mxu0 0.0
        %v673 = vand.u32 %v300, 4294901760
        %674 = vmatmul.mubr.f32.gmra.mrb[0].mxu0 %v673
        %v675 = vpop.f32.mrb[0].mxu0
        %v676 = vadd.f32 %v602, %v675
        %v677 = vpop.f32.mrb[0].mxu0
        %678 = vdwg.mxu0
        %679 = vmatprep.subr.mxu0 0.0
        %v680 = vand.u32 %v303, 4294901760
        %681 = vmatpush1.xpose.msra.mxu0 %v680
        %682 = vmatprep.subr.mxu0 0.0
        %683 = vmatpush1.xpose.msra.mxu0 0.0
        %684 = vmatprep.subr.mxu0 0.0
        %685 = vmatpush1.xpose.msra.mxu0 0.0
        %686 = vmatprep.subr.mxu0 0.0
        %687 = vmatpush1.xpose.msra.mxu0 0.0
        %688 = vmatprep.subr.mxu0 0.0
        %689 = vmatpush1.xpose.msra.mxu0 0.0
        %690 = vmatprep.subr.mxu0 0.0
        %691 = vmatpush1.xpose.msra.mxu0 0.0
        %692 = vmatprep.subr.mxu0 0.0
        %693 = vmatpush1.xpose.msra.mxu0 0.0
        %694 = vmatprep.subr.mxu0 0.0
        %695 = vmatpush1.xpose.msra.mxu0 0.0
        %696 = vmatprep.subr.mxu0 0.0
        %697 = vmatpush1.xpose.msra.mxu0 0.0
        %698 = vmatprep.subr.mxu0 0.0
        %699 = vmatpush1.xpose.msra.mxu0 0.0
        %700 = vmatprep.subr.mxu0 0.0
        %701 = vmatpush1.xpose.msra.mxu0 0.0
        %702 = vmatprep.subr.mxu0 0.0
        %703 = vmatpush1.xpose.msra.mxu0 0.0
        %704 = vmatprep.subr.mxu0 0.0
        %705 = vmatpush1.xpose.msra.mxu0 0.0
        %706 = vmatprep.subr.mxu0 0.0
        %707 = vmatpush1.xpose.msra.mxu0 0.0
        %708 = vmatprep.subr.mxu0 0.0
        %709 = vmatpush1.xpose.msra.mxu0 0.0
        %710 = vmatprep.subr.mxu0 0.0
        %711 = vmatpush1.xpose.msra.mxu0 0.0
        %712 = vmatprep.subr.mxu0 0.0
        %713 = vmatpush1.xpose.msra.mxu0 0.0
        %714 = vmatprep.subr.mxu0 0.0
        %715 = vmatpush1.xpose.msra.mxu0 0.0
        %716 = vmatprep.subr.mxu0 0.0
        %717 = vmatpush1.xpose.msra.mxu0 0.0
        %718 = vmatprep.subr.mxu0 0.0
        %719 = vmatpush1.xpose.msra.mxu0 0.0
        %720 = vmatprep.subr.mxu0 0.0
        %721 = vmatpush1.xpose.msra.mxu0 0.0
        %722 = vmatprep.subr.mxu0 0.0
        %723 = vmatpush1.xpose.msra.mxu0 0.0
        %724 = vmatprep.subr.mxu0 0.0
        %725 = vmatpush1.xpose.msra.mxu0 0.0
        %726 = vmatprep.subr.mxu0 0.0
        %727 = vmatpush1.xpose.msra.mxu0 0.0
        %728 = vmatprep.subr.mxu0 0.0
        %729 = vmatpush1.xpose.msra.mxu0 0.0
        %730 = vmatprep.subr.mxu0 0.0
        %731 = vmatpush1.xpose.msra.mxu0 0.0
        %732 = vmatprep.subr.mxu0 0.0
        %733 = vmatpush1.xpose.msra.mxu0 0.0
        %734 = vmatprep.subr.mxu0 0.0
        %735 = vmatpush1.xpose.msra.mxu0 0.0
        %736 = vmatprep.subr.mxu0 0.0
        %737 = vmatpush1.xpose.msra.mxu0 0.0
        %738 = vmatprep.subr.mxu0 0.0
        %739 = vmatpush1.xpose.msra.mxu0 0.0
        %740 = vmatprep.subr.mxu0 0.0
        %741 = vmatpush1.xpose.msra.mxu0 0.0
        %742 = vmatprep.subr.mxu0 0.0
        %743 = vmatpush1.xpose.msra.mxu0 0.0
        %744 = vmatprep.mubr.f32.mxu0 0.0
        %v745 = vand.u32 %v300, 4294901760
        %746 = vmatmul.mubr.f32.gmra.mrb[0].mxu0 %v745
        %v747 = vpop.f32.mrb[0].mxu0
        %v748 = vadd.f32 %v676, %v747
        %v749 = vpop.f32.mrb[0].mxu0
        %750 = vdwg.mxu0
        %v751 = vmul.f32 %v748, 5.656854
        %v752 = vld [vmem:[#allocation2] sm:$0xff]
        %vm753 = vcmask 64512
        %v754 = vsel %vm753, %v751, -inf
        %755 = vmax.xlane.f32.xlu0 %v754
        %v756 = vpop.xlane.xlu0 %755
        %v757 = vmax.f32 %v752, %v756
        %v758 = vsub.f32 %v752, %v757
        %v759 = vmul.f32 %v758, 1.442695
        %v760 = vpow.pop %v759
        %762 = vset.pattern.permute.xlu0 0
        %763 = vperm.xlu0 %762, %v757
        %v764 = vpop.permute.xlu0 %763
        %v766 = vsub.f32 %v751, %v764
        %v767 = vmul.f32 %v766, 1.442695
        %v768 = vpow.pop %v767
        %v769 = vld [vmem:[#allocation3] sm:$0xff]
        %v770 = vmul.f32 %v760, %v769
        %v771 = vsel %vm753, %v768, 0.0
        %772 = vadd.xlane.f32.xlu0 %v771
        %v773 = vpop.xlane.xlu0 %772
        %v774 = vadd.f32 %v770, %v773
        %vm775 = vcmask 7168
        %776 = vst.msk [vmem:[#allocation3] sm:$0xff] %vm775, %v774
        %v777 = vld [vmem:[#allocation4] sm:$0xff]
        %779 = vset.pattern.permute.xlu0 0
        %780 = vperm.xlu0 %779, %v760
        %v781 = vpop.permute.xlu0 %780
        %v783 = vmul.f32 %v781, %v777
        %v784 = vld [vmem:[%s254] sm:$0xff]
        %v786 = vsel %vm753, %v768, 0
        %788 = vmatprep.subr.mxu0 0.0
        %v789 = vand.u32 %v784, 4294901760
        %790 = vmatpush1.msra.mxu0 %v789
        %791 = vmatprep.subr.mxu0 0.0
        %792 = vmatpush1.msra.mxu0 0.0
        %793 = vmatprep.subr.mxu0 0.0
        %794 = vmatpush1.msra.mxu0 0.0
        %795 = vmatprep.subr.mxu0 0.0
        %796 = vmatpush1.msra.mxu0 0.0
        %797 = vmatprep.subr.mxu0 0.0
        %798 = vmatpush1.msra.mxu0 0.0
        %799 = vmatprep.subr.mxu0 0.0
        %800 = vmatpush1.msra.mxu0 0.0
        %801 = vmatprep.subr.mxu0 0.0
        %802 = vmatpush1.msra.mxu0 0.0
        %803 = vmatprep.subr.mxu0 0.0
        %804 = vmatpush1.msra.mxu0 0.0
        %805 = vmatprep.subr.mxu0 0.0
        %806 = vmatpush1.msra.mxu0 0.0
        %807 = vmatprep.subr.mxu0 0.0
        %808 = vmatpush1.msra.mxu0 0.0
        %809 = vmatprep.subr.mxu0 0.0
        %810 = vmatpush1.msra.mxu0 0.0
        %811 = vmatprep.subr.mxu0 0.0
        %812 = vmatpush1.msra.mxu0 0.0
        %813 = vmatprep.subr.mxu0 0.0
        %814 = vmatpush1.msra.mxu0 0.0
        %815 = vmatprep.subr.mxu0 0.0
        %816 = vmatpush1.msra.mxu0 0.0
        %817 = vmatprep.subr.mxu0 0.0
        %818 = vmatpush1.msra.mxu0 0.0
        %819 = vmatprep.subr.mxu0 0.0
        %820 = vmatpush1.msra.mxu0 0.0
        %821 = vmatprep.subr.mxu0 0.0
        %822 = vmatpush1.msra.mxu0 0.0
        %823 = vmatprep.subr.mxu0 0.0
        %824 = vmatpush1.msra.mxu0 0.0
        %825 = vmatprep.subr.mxu0 0.0
        %826 = vmatpush1.msra.mxu0 0.0
        %827 = vmatprep.subr.mxu0 0.0
        %828 = vmatpush1.msra.mxu0 0.0
        %829 = vmatprep.subr.mxu0 0.0
        %830 = vmatpush1.msra.mxu0 0.0
        %831 = vmatprep.subr.mxu0 0.0
        %832 = vmatpush1.msra.mxu0 0.0
        %833 = vmatprep.subr.mxu0 0.0
        %834 = vmatpush1.msra.mxu0 0.0
        %835 = vmatprep.subr.mxu0 0.0
        %836 = vmatpush1.msra.mxu0 0.0
        %837 = vmatprep.subr.mxu0 0.0
        %838 = vmatpush1.msra.mxu0 0.0
        %839 = vmatprep.subr.mxu0 0.0
        %840 = vmatpush1.msra.mxu0 0.0
        %841 = vmatprep.subr.mxu0 0.0
        %842 = vmatpush1.msra.mxu0 0.0
        %843 = vmatprep.subr.mxu0 0.0
        %844 = vmatpush1.msra.mxu0 0.0
        %845 = vmatprep.subr.mxu0 0.0
        %846 = vmatpush1.msra.mxu0 0.0
        %847 = vmatprep.subr.mxu0 0.0
        %848 = vmatpush1.msra.mxu0 0.0
        %849 = vmatprep.subr.mxu0 0.0
        %850 = vmatpush1.msra.mxu0 0.0
        %851 = vmatprep.subr.mxu0 0.0
        %852 = vmatpush1.msra.mxu0 0.0
        %853 = vmatprep.mubr.f32.mxu0 0.0
        %v854 = vand.u32 %v786, 4294901760
        %v855 = vsub.f32 %v786, %v854
        %v856 = vand.u32 %v855, 4294901760
        %v857 = vsub.f32 %v855, %v856
        %v858 = vand.u32 %v857, 4294901760
        %859 = vmatmul.mubr.f32.gmra.mrb[0].mxu0 %v858
        %v860 = vpop.f32.mrb[0].mxu0
        %v861 = vadd.f32 0.0, %v860
        %v862 = vpop.f32.mrb[0].mxu0
        %863 = vdwg.mxu0
        %864 = vmatprep.subr.mxu0 0.0
        %v865 = vand.u32 %v784, 4294901760
        %v866 = vsub.f32 %v784, %v865
        %v867 = vand.u32 %v866, 4294901760
        %v868 = vsub.f32 %v866, %v867
        %v869 = vand.u32 %v868, 4294901760
        %870 = vmatpush1.msra.mxu0 %v869
        %871 = vmatprep.subr.mxu0 0.0
        %872 = vmatpush1.msra.mxu0 0.0
        %873 = vmatprep.subr.mxu0 0.0
        %874 = vmatpush1.msra.mxu0 0.0
        %875 = vmatprep.subr.mxu0 0.0
        %876 = vmatpush1.msra.mxu0 0.0
        %877 = vmatprep.subr.mxu0 0.0
        %878 = vmatpush1.msra.mxu0 0.0
        %879 = vmatprep.subr.mxu0 0.0
        %880 = vmatpush1.msra.mxu0 0.0
        %881 = vmatprep.subr.mxu0 0.0
        %882 = vmatpush1.msra.mxu0 0.0
        %883 = vmatprep.subr.mxu0 0.0
        %884 = vmatpush1.msra.mxu0 0.0
        %885 = vmatprep.subr.mxu0 0.0
        %886 = vmatpush1.msra.mxu0 0.0
        %887 = vmatprep.subr.mxu0 0.0
        %888 = vmatpush1.msra.mxu0 0.0
        %889 = vmatprep.subr.mxu0 0.0
        %890 = vmatpush1.msra.mxu0 0.0
        %891 = vmatprep.subr.mxu0 0.0
        %892 = vmatpush1.msra.mxu0 0.0
        %893 = vmatprep.subr.mxu0 0.0
        %894 = vmatpush1.msra.mxu0 0.0
        %895 = vmatprep.subr.mxu0 0.0
        %896 = vmatpush1.msra.mxu0 0.0
        %897 = vmatprep.subr.mxu0 0.0
        %898 = vmatpush1.msra.mxu0 0.0
        %899 = vmatprep.subr.mxu0 0.0
        %900 = vmatpush1.msra.mxu0 0.0
        %901 = vmatprep.subr.mxu0 0.0
        %902 = vmatpush1.msra.mxu0 0.0
        %903 = vmatprep.subr.mxu0 0.0
        %904 = vmatpush1.msra.mxu0 0.0
        %905 = vmatprep.subr.mxu0 0.0
        %906 = vmatpush1.msra.mxu0 0.0
        %907 = vmatprep.subr.mxu0 0.0
        %908 = vmatpush1.msra.mxu0 0.0
        %909 = vmatprep.subr.mxu0 0.0
        %910 = vmatpush1.msra.mxu0 0.0
        %911 = vmatprep.subr.mxu0 0.0
        %912 = vmatpush1.msra.mxu0 0.0
        %913 = vmatprep.subr.mxu0 0.0
        %914 = vmatpush1.msra.mxu0 0.0
        %915 = vmatprep.subr.mxu0 0.0
        %916 = vmatpush1.msra.mxu0 0.0
        %917 = vmatprep.subr.mxu0 0.0
        %918 = vmatpush1.msra.mxu0 0.0
        %919 = vmatprep.subr.mxu0 0.0
        %920 = vmatpush1.msra.mxu0 0.0
        %921 = vmatprep.subr.mxu0 0.0
        %922 = vmatpush1.msra.mxu0 0.0
        %923 = vmatprep.subr.mxu0 0.0
        %924 = vmatpush1.msra.mxu0 0.0
        %925 = vmatprep.subr.mxu0 0.0
        %926 = vmatpush1.msra.mxu0 0.0
        %927 = vmatprep.subr.mxu0 0.0
        %928 = vmatpush1.msra.mxu0 0.0
        %929 = vmatprep.subr.mxu0 0.0
        %930 = vmatpush1.msra.mxu0 0.0
        %931 = vmatprep.subr.mxu0 0.0
        %932 = vmatpush1.msra.mxu0 0.0
        %933 = vmatprep.mubr.f32.mxu0 0.0
        %v934 = vand.u32 %v786, 4294901760
        %935 = vmatmul.mubr.f32.gmra.mrb[0].mxu0 %v934
        %v936 = vpop.f32.mrb[0].mxu0
        %v937 = vadd.f32 %v861, %v936
        %v938 = vpop.f32.mrb[0].mxu0
        %939 = vdwg.mxu0
        %940 = vmatprep.subr.mxu0 0.0
        %v941 = vand.u32 %v784, 4294901760
        %v942 = vsub.f32 %v784, %v941
        %943 = vmatpush1.msra.mxu0 %v942
        %944 = vmatprep.subr.mxu0 0.0
        %945 = vmatpush1.msra.mxu0 0.0
        %946 = vmatprep.subr.mxu0 0.0
        %947 = vmatpush1.msra.mxu0 0.0
        %948 = vmatprep.subr.mxu0 0.0
        %949 = vmatpush1.msra.mxu0 0.0
        %950 = vmatprep.subr.mxu0 0.0
        %951 = vmatpush1.msra.mxu0 0.0
        %952 = vmatprep.subr.mxu0 0.0
        %953 = vmatpush1.msra.mxu0 0.0
        %954 = vmatprep.subr.mxu0 0.0
        %955 = vmatpush1.msra.mxu0 0.0
        %956 = vmatprep.subr.mxu0 0.0
        %957 = vmatpush1.msra.mxu0 0.0
        %958 = vmatprep.subr.mxu0 0.0
        %959 = vmatpush1.msra.mxu0 0.0
        %960 = vmatprep.subr.mxu0 0.0
        %961 = vmatpush1.msra.mxu0 0.0
        %962 = vmatprep.subr.mxu0 0.0
        %963 = vmatpush1.msra.mxu0 0.0
        %964 = vmatprep.subr.mxu0 0.0
        %965 = vmatpush1.msra.mxu0 0.0
        %966 = vmatprep.subr.mxu0 0.0
        %967 = vmatpush1.msra.mxu0 0.0
        %968 = vmatprep.subr.mxu0 0.0
        %969 = vmatpush1.msra.mxu0 0.0
        %970 = vmatprep.subr.mxu0 0.0
        %971 = vmatpush1.msra.mxu0 0.0
        %972 = vmatprep.subr.mxu0 0.0
        %973 = vmatpush1.msra.mxu0 0.0
        %974 = vmatprep.subr.mxu0 0.0
        %975 = vmatpush1.msra.mxu0 0.0
        %976 = vmatprep.subr.mxu0 0.0
        %977 = vmatpush1.msra.mxu0 0.0
        %978 = vmatprep.subr.mxu0 0.0
        %979 = vmatpush1.msra.mxu0 0.0
        %980 = vmatprep.subr.mxu0 0.0
        %981 = vmatpush1.msra.mxu0 0.0
        %982 = vmatprep.subr.mxu0 0.0
        %983 = vmatpush1.msra.mxu0 0.0
        %984 = vmatprep.subr.mxu0 0.0
        %985 = vmatpush1.msra.mxu0 0.0
        %986 = vmatprep.subr.mxu0 0.0
        %987 = vmatpush1.msra.mxu0 0.0
        %988 = vmatprep.subr.mxu0 0.0
        %989 = vmatpush1.msra.mxu0 0.0
        %990 = vmatprep.subr.mxu0 0.0
        %991 = vmatpush1.msra.mxu0 0.0
        %992 = vmatprep.subr.mxu0 0.0
        %993 = vmatpush1.msra.mxu0 0.0
        %994 = vmatprep.subr.mxu0 0.0
        %995 = vmatpush1.msra.mxu0 0.0
        %996 = vmatprep.subr.mxu0 0.0
        %997 = vmatpush1.msra.mxu0 0.0
        %998 = vmatprep.subr.mxu0 0.0
        %999 = vmatpush1.msra.mxu0 0.0
        %1000 = vmatprep.subr.mxu0 0.0
        %1001 = vmatpush1.msra.mxu0 0.0
        %1002 = vmatprep.subr.mxu0 0.0
        %1003 = vmatpush1.msra.mxu0 0.0
        %1004 = vmatprep.subr.mxu0 0.0
        %1005 = vmatpush1.msra.mxu0 0.0
        %1006 = vmatprep.mubr.f32.mxu0 0.0
        %v1007 = vand.u32 %v786, 4294901760
        %v1008 = vsub.f32 %v786, %v1007
        %1009 = vmatmul.mubr.f32.gmra.mrb[0].mxu0 %v1008
        %v1010 = vpop.f32.mrb[0].mxu0
        %v1011 = vadd.f32 %v937, %v1010
        %v1012 = vpop.f32.mrb[0].mxu0
        %1013 = vdwg.mxu0
        %1014 = vmatprep.subr.mxu0 0.0
        %v1015 = vand.u32 %v784, 4294901760
        %1016 = vmatpush1.msra.mxu0 %v1015
        %1017 = vmatprep.subr.mxu0 0.0
        %1018 = vmatpush1.msra.mxu0 0.0
        %1019 = vmatprep.subr.mxu0 0.0
        %1020 = vmatpush1.msra.mxu0 0.0
        %1021 = vmatprep.subr.mxu0 0.0
        %1022 = vmatpush1.msra.mxu0 0.0
        %1023 = vmatprep.subr.mxu0 0.0
        %1024 = vmatpush1.msra.mxu0 0.0
        %1025 = vmatprep.subr.mxu0 0.0
        %1026 = vmatpush1.msra.mxu0 0.0
        %1027 = vmatprep.subr.mxu0 0.0
        %1028 = vmatpush1.msra.mxu0 0.0
        %1029 = vmatprep.subr.mxu0 0.0
        %1030 = vmatpush1.msra.mxu0 0.0
        %1031 = vmatprep.subr.mxu0 0.0
        %1032 = vmatpush1.msra.mxu0 0.0
        %1033 = vmatprep.subr.mxu0 0.0
        %1034 = vmatpush1.msra.mxu0 0.0
        %1035 = vmatprep.subr.mxu0 0.0
        %1036 = vmatpush1.msra.mxu0 0.0
        %1037 = vmatprep.subr.mxu0 0.0
        %1038 = vmatpush1.msra.mxu0 0.0
        %1039 = vmatprep.subr.mxu0 0.0
        %1040 = vmatpush1.msra.mxu0 0.0
        %1041 = vmatprep.subr.mxu0 0.0
        %1042 = vmatpush1.msra.mxu0 0.0
        %1043 = vmatprep.subr.mxu0 0.0
        %1044 = vmatpush1.msra.mxu0 0.0
        %1045 = vmatprep.subr.mxu0 0.0
        %1046 = vmatpush1.msra.mxu0 0.0
        %1047 = vmatprep.subr.mxu0 0.0
        %1048 = vmatpush1.msra.mxu0 0.0
        %1049 = vmatprep.subr.mxu0 0.0
        %1050 = vmatpush1.msra.mxu0 0.0
        %1051 = vmatprep.subr.mxu0 0.0
        %1052 = vmatpush1.msra.mxu0 0.0
        %1053 = vmatprep.subr.mxu0 0.0
        %1054 = vmatpush1.msra.mxu0 0.0
        %1055 = vmatprep.subr.mxu0 0.0
        %1056 = vmatpush1.msra.mxu0 0.0
        %1057 = vmatprep.subr.mxu0 0.0
        %1058 = vmatpush1.msra.mxu0 0.0
        %1059 = vmatprep.subr.mxu0 0.0
        %1060 = vmatpush1.msra.mxu0 0.0
        %1061 = vmatprep.subr.mxu0 0.0
        %1062 = vmatpush1.msra.mxu0 0.0
        %1063 = vmatprep.subr.mxu0 0.0
        %1064 = vmatpush1.msra.mxu0 0.0
        %1065 = vmatprep.subr.mxu0 0.0
        %1066 = vmatpush1.msra.mxu0 0.0
        %1067 = vmatprep.subr.mxu0 0.0
        %1068 = vmatpush1.msra.mxu0 0.0
        %1069 = vmatprep.subr.mxu0 0.0
        %1070 = vmatpush1.msra.mxu0 0.0
        %1071 = vmatprep.subr.mxu0 0.0
        %1072 = vmatpush1.msra.mxu0 0.0
        %1073 = vmatprep.subr.mxu0 0.0
        %1074 = vmatpush1.msra.mxu0 0.0
        %1075 = vmatprep.subr.mxu0 0.0
        %1076 = vmatpush1.msra.mxu0 0.0
        %1077 = vmatprep.subr.mxu0 0.0
        %1078 = vmatpush1.msra.mxu0 0.0
        %1079 = vmatprep.mubr.f32.mxu0 0.0
        %v1080 = vand.u32 %v786, 4294901760
        %v1081 = vsub.f32 %v786, %v1080
        %v1082 = vand.u32 %v1081, 4294901760
        %1083 = vmatmul.mubr.f32.gmra.mrb[0].mxu0 %v1082
        %v1084 = vpop.f32.mrb[0].mxu0
        %v1085 = vadd.f32 %v1011, %v1084
        %v1086 = vpop.f32.mrb[0].mxu0
        %1087 = vdwg.mxu0
        %1088 = vmatprep.subr.mxu0 0.0
        %v1089 = vand.u32 %v784, 4294901760
        %v1090 = vsub.f32 %v784, %v1089
        %v1091 = vand.u32 %v1090, 4294901760
        %1092 = vmatpush1.msra.mxu0 %v1091
        %1093 = vmatprep.subr.mxu0 0.0
        %1094 = vmatpush1.msra.mxu0 0.0
        %1095 = vmatprep.subr.mxu0 0.0
        %1096 = vmatpush1.msra.mxu0 0.0
        %1097 = vmatprep.subr.mxu0 0.0
        %1098 = vmatpush1.msra.mxu0 0.0
        %1099 = vmatprep.subr.mxu0 0.0
        %1100 = vmatpush1.msra.mxu0 0.0
        %1101 = vmatprep.subr.mxu0 0.0
        %1102 = vmatpush1.msra.mxu0 0.0
        %1103 = vmatprep.subr.mxu0 0.0
        %1104 = vmatpush1.msra.mxu0 0.0
        %1105 = vmatprep.subr.mxu0 0.0
        %1106 = vmatpush1.msra.mxu0 0.0
        %1107 = vmatprep.subr.mxu0 0.0
        %1108 = vmatpush1.msra.mxu0 0.0
        %1109 = vmatprep.subr.mxu0 0.0
        %1110 = vmatpush1.msra.mxu0 0.0
        %1111 = vmatprep.subr.mxu0 0.0
        %1112 = vmatpush1.msra.mxu0 0.0
        %1113 = vmatprep.subr.mxu0 0.0
        %1114 = vmatpush1.msra.mxu0 0.0
        %1115 = vmatprep.subr.mxu0 0.0
        %1116 = vmatpush1.msra.mxu0 0.0
        %1117 = vmatprep.subr.mxu0 0.0
        %1118 = vmatpush1.msra.mxu0 0.0
        %1119 = vmatprep.subr.mxu0 0.0
        %1120 = vmatpush1.msra.mxu0 0.0
        %1121 = vmatprep.subr.mxu0 0.0
        %1122 = vmatpush1.msra.mxu0 0.0
        %1123 = vmatprep.subr.mxu0 0.0
        %1124 = vmatpush1.msra.mxu0 0.0
        %1125 = vmatprep.subr.mxu0 0.0
        %1126 = vmatpush1.msra.mxu0 0.0
        %1127 = vmatprep.subr.mxu0 0.0
        %1128 = vmatpush1.msra.mxu0 0.0
        %1129 = vmatprep.subr.mxu0 0.0
        %1130 = vmatpush1.msra.mxu0 0.0
        %1131 = vmatprep.subr.mxu0 0.0
        %1132 = vmatpush1.msra.mxu0 0.0
        %1133 = vmatprep.subr.mxu0 0.0
        %1134 = vmatpush1.msra.mxu0 0.0
        %1135 = vmatprep.subr.mxu0 0.0
        %1136 = vmatpush1.msra.mxu0 0.0
        %1137 = vmatprep.subr.mxu0 0.0
        %1138 = vmatpush1.msra.mxu0 0.0
        %1139 = vmatprep.subr.mxu0 0.0
        %1140 = vmatpush1.msra.mxu0 0.0
        %1141 = vmatprep.subr.mxu0 0.0
        %1142 = vmatpush1.msra.mxu0 0.0
        %1143 = vmatprep.subr.mxu0 0.0
        %1144 = vmatpush1.msra.mxu0 0.0
        %1145 = vmatprep.subr.mxu0 0.0
        %1146 = vmatpush1.msra.mxu0 0.0
        %1147 = vmatprep.subr.mxu0 0.0
        %1148 = vmatpush1.msra.mxu0 0.0
        %1149 = vmatprep.subr.mxu0 0.0
        %1150 = vmatpush1.msra.mxu0 0.0
        %1151 = vmatprep.subr.mxu0 0.0
        %1152 = vmatpush1.msra.mxu0 0.0
        %1153 = vmatprep.subr.mxu0 0.0
        %1154 = vmatpush1.msra.mxu0 0.0
        %1155 = vmatprep.mubr.f32.mxu0 0.0
        %v1156 = vand.u32 %v786, 4294901760
        %1157 = vmatmul.mubr.f32.gmra.mrb[0].mxu0 %v1156
        %v1158 = vpop.f32.mrb[0].mxu0
        %v1159 = vadd.f32 %v1085, %v1158
        %v1160 = vpop.f32.mrb[0].mxu0
        %1161 = vdwg.mxu0
        %1162 = vmatprep.subr.mxu0 0.0
        %v1163 = vand.u32 %v784, 4294901760
        %1164 = vmatpush1.msra.mxu0 %v1163
        %1165 = vmatprep.subr.mxu0 0.0
        %1166 = vmatpush1.msra.mxu0 0.0
        %1167 = vmatprep.subr.mxu0 0.0
        %1168 = vmatpush1.msra.mxu0 0.0
        %1169 = vmatprep.subr.mxu0 0.0
        %1170 = vmatpush1.msra.mxu0 0.0
        %1171 = vmatprep.subr.mxu0 0.0
        %1172 = vmatpush1.msra.mxu0 0.0
        %1173 = vmatprep.subr.mxu0 0.0
        %1174 = vmatpush1.msra.mxu0 0.0
        %1175 = vmatprep.subr.mxu0 0.0
        %1176 = vmatpush1.msra.mxu0 0.0
        %1177 = vmatprep.subr.mxu0 0.0
        %1178 = vmatpush1.msra.mxu0 0.0
        %1179 = vmatprep.subr.mxu0 0.0
        %1180 = vmatpush1.msra.mxu0 0.0
        %1181 = vmatprep.subr.mxu0 0.0
        %1182 = vmatpush1.msra.mxu0 0.0
        %1183 = vmatprep.subr.mxu0 0.0
        %1184 = vmatpush1.msra.mxu0 0.0
        %1185 = vmatprep.subr.mxu0 0.0
        %1186 = vmatpush1.msra.mxu0 0.0
        %1187 = vmatprep.subr.mxu0 0.0
        %1188 = vmatpush1.msra.mxu0 0.0
        %1189 = vmatprep.subr.mxu0 0.0
        %1190 = vmatpush1.msra.mxu0 0.0
        %1191 = vmatprep.subr.mxu0 0.0
        %1192 = vmatpush1.msra.mxu0 0.0
        %1193 = vmatprep.subr.mxu0 0.0
        %1194 = vmatpush1.msra.mxu0 0.0
        %1195 = vmatprep.subr.mxu0 0.0
        %1196 = vmatpush1.msra.mxu0 0.0
        %1197 = vmatprep.subr.mxu0 0.0
        %1198 = vmatpush1.msra.mxu0 0.0
        %1199 = vmatprep.subr.mxu0 0.0
        %1200 = vmatpush1.msra.mxu0 0.0
        %1201 = vmatprep.subr.mxu0 0.0
        %1202 = vmatpush1.msra.mxu0 0.0
        %1203 = vmatprep.subr.mxu0 0.0
        %1204 = vmatpush1.msra.mxu0 0.0
        %1205 = vmatprep.subr.mxu0 0.0
        %1206 = vmatpush1.msra.mxu0 0.0
        %1207 = vmatprep.subr.mxu0 0.0
        %1208 = vmatpush1.msra.mxu0 0.0
        %1209 = vmatprep.subr.mxu0 0.0
        %1210 = vmatpush1.msra.mxu0 0.0
        %1211 = vmatprep.subr.mxu0 0.0
        %1212 = vmatpush1.msra.mxu0 0.0
        %1213 = vmatprep.subr.mxu0 0.0
        %1214 = vmatpush1.msra.mxu0 0.0
        %1215 = vmatprep.subr.mxu0 0.0
        %1216 = vmatpush1.msra.mxu0 0.0
        %1217 = vmatprep.subr.mxu0 0.0
        %1218 = vmatpush1.msra.mxu0 0.0
        %1219 = vmatprep.subr.mxu0 0.0
        %1220 = vmatpush1.msra.mxu0 0.0
        %1221 = vmatprep.subr.mxu0 0.0
        %1222 = vmatpush1.msra.mxu0 0.0
        %1223 = vmatprep.subr.mxu0 0.0
        %1224 = vmatpush1.msra.mxu0 0.0
        %1225 = vmatprep.subr.mxu0 0.0
        %1226 = vmatpush1.msra.mxu0 0.0
        %1227 = vmatprep.mubr.f32.mxu0 0.0
        %v1228 = vand.u32 %v786, 4294901760
        %1229 = vmatmul.mubr.f32.gmra.mrb[0].mxu0 %v1228
        %v1230 = vpop.f32.mrb[0].mxu0
        %v1231 = vadd.f32 %v1159, %v1230
        %v1232 = vpop.f32.mrb[0].mxu0
        %1233 = vdwg.mxu0
        %v1234 = vadd.f32 %v783, %v1231
        %1235 = vst.msk [vmem:[#allocation4] sm:$0xff] %vm298, %v1234
        %1236 = vst.msk [vmem:[#allocation2] sm:$0xff] %vm775, %v757
        // Predicated region
        $region49: #{tpu_custom_call.1} parent=31 // pred_check
          %p1237 = pneg %p287
        $region50: #{tpu_custom_call.1} parent=31 // pred_check_branch
          %1239 = sbr.rel (%p1237) target = $region52
        $region51: #{tpu_custom_call.1} parent=31 // pred_region
          %v1240 = vld [vmem:[#allocation3] sm:$0xff]
          %v1241 = vrcp.pop %v1240
          %v1242 = vld [vmem:[#allocation4] sm:$0xff]
          %1244 = vset.pattern.permute.xlu0 0
          %1245 = vperm.xlu0 %1244, %v1241
          %v1246 = vpop.permute.xlu0 %1245
          %v1248 = vmul.f32 %v1242, %v1246
          %1249 = vst.msk [vmem:[%s286] sm:$0xff] %vm298, %v1248
        $region52: #{tpu_custom_call.1} parent=31 // pred_fallthru
          _
        %s1250 = sand.u32 %s136, 1
        %s1251 = scalar_lea.sflag [#allocation7], %s1250
        %s1252 = sand.u32 %s136, 1
        %s1253 = smul.addr %s1252, 8
        %s1254 = scalar_lea.vmem [#allocation11], %s1253
        // Predicated region
        $region53: #{tpu_custom_call.1} parent=31 // pred_check
          %p1255 = pneg %p146
        $region54: #{tpu_custom_call.1} parent=31 // pred_check_branch
          %1257 = sbr.rel (%p1255) target = $region56
        $region55: #{tpu_custom_call.1} parent=31 // pred_region
          %s1259 = ssub.s32 128, 128
          %1260 = vsyncadd %s1251, %s1259
          %s1261 = sadd.s32 %s29, %s28
          %s1262 = smul.addr %s1261, 128
          %s1263 = scalar_lea.hbm %s3, %s1262
          %s1265 = sshll.u32 %s1254, 4
          %s1266 = int_to_ptr.vmem [resolvable:$true] %s1265
          %1268 = dma.vmem_to_hbm [thread:$0]  %s1266, 128, %s1263, %s1251
        $region56: #{tpu_custom_call.1} parent=31 // pred_fallthru
          _
      $region32: #{tpu_custom_call.1} parent=5 // pred_fallthru
        _
      %p1269 = scmp.le.s32.totalorder 2, %s18
      // Predicated region
      $region57: #{tpu_custom_call.1} parent=5 // pred_check
        %p1270 = pneg %p1269
      $region58: #{tpu_custom_call.1} parent=5 // pred_check_branch
        %1272 = sbr.rel (%p1270) target = $region60
      $region59: #{tpu_custom_call.1} parent=5 // pred_region
        %s1273 = ssub.s32 %s18, 2
        // Predicated region
        $region61: #{tpu_custom_call.1} parent=59 // pred_check
          %p1274 = pneg %p152
        $region62: #{tpu_custom_call.1} parent=59 // pred_check_branch
          %1276 = sbr.rel (%p1274) target = $region64
        $region63: #{tpu_custom_call.1} parent=59 // pred_region
          %s1277 = sand.u32 %s137, 1
          %s1278 = scalar_lea.sflag [#allocation7], %s1277
          %s1279 = sand.u32 %s137, 1
          %s1280 = smul.addr %s1279, 8
          %s1281 = scalar_lea.vmem [#allocation11], %s1280
          %1282 = dma.done %s1278, 128
        $region64: #{tpu_custom_call.1} parent=59 // pred_fallthru
          _
      $region60: #{tpu_custom_call.1} parent=5 // pred_fallthru
        _
    $region6: #{tpu_custom_call.1} parent=1 // loop_footer
      %s22 = sadd.s32 1, %s18
    $region7: #{tpu_custom_call.1} parent=1 // loop_footer_branch
      %17 = sbr.rel target = $region3
    $region8: #{tpu_custom_call.1} parent=1 // loop_exit
      _
    %1283 = vsyncpa [#allocation6], 1
    %s1284 = scalar_lea.sflag [#allocation6], 1
    %1285 = vsyncpa %s1284, 1
    %1286 = vsyncpa [#allocation9], 1
    %s1287 = scalar_lea.sflag [#allocation9], 1
    %1288 = vsyncpa %s1287, 1
    %1289 = vsyncpa [#allocation7], 1
    %s1290 = scalar_lea.sflag [#allocation7], 1
    %1291 = vsyncpa %s1290, 1

</llo_original>
